<compile_context>
chip_gen: v7x
topology: tpu7x:2x2x1
jax: 0.10.0
libtpu: 0.0.40
codegen_flags: <defaults>
</compile_context>

<pallas_src>
import math

import jax
import jax.numpy as jnp
from jax.experimental import pallas as pl
from jax.experimental.pallas import tpu as pltpu

_INV_SQRT2 = 1.0 / math.sqrt(2.0)


def _round_up(x, m):
    return (x + m - 1) // m * m


def _vmem_capacity_bytes():
    try:
        cap = int(pltpu.get_tpu_info().vmem_capacity_bytes)
        if cap > 0:
            return cap
    except Exception:
        pass
    return 64 << 20  # conservative fallback (v7x per-TC VMEM); v5e/v6e have 128 MiB.


def ffn_kernel(x_ref, w1_ref, b1_ref, w2_ref, b2_ref, o_ref, acc_ref):
    j = pl.program_id(1)

    @pl.when(j == 0)
    def _():
        acc_ref[...] = jnp.zeros_like(acc_ref)

    # First linear for this hidden tile: (TM, D) @ (D, TH); bf16 MXU inputs, f32 accumulation.
    h = jnp.dot(x_ref[...], w1_ref[...], preferred_element_type=jnp.float32)
    h = h + b1_ref[...]
    # Exact GELU (matches nn.GELU() default, approximate='none'), computed in f32.
    h = 0.5 * h * (1.0 + jax.lax.erf(h * _INV_SQRT2))
    # Dropout(p=0.0) is the identity -> elided.
    # TODO(synk): dropout with p > 0 (training mode) is not implemented; module default p=0.0.

    # Second linear, partial over the hidden axis; cast back to the MXU dtype, accumulate in f32.
    acc_ref[...] += jnp.dot(h.astype(w2_ref.dtype), w2_ref[...],
                            preferred_element_type=jnp.float32)

    @pl.when(j == pl.num_programs(1) - 1)
    def _():
        # Output bias added exactly once, at the final reduction step.
        o_ref[...] = (acc_ref[...] + b2_ref[...]).astype(o_ref.dtype)


def feed_forward(x, w1, b1, w2, b2, *, tm=512, th=None, mxu_dtype=jnp.bfloat16):
    """x: (batch, seq, dim). w1: (dim, hidden), w2: (hidden, dim). Returns (batch, seq, dim).

    Matmuls run on the MXU in `mxu_dtype` (bf16 by default) with f32 accumulation; GELU and bias
    adds are f32.  Numerics therefore differ from a Precision.HIGHEST f32 reference at ~bf16 level.
    """
    B, S, D = x.shape
    H = w1.shape[1]
    M = B * S
    out_dtype = x.dtype

    mxu_bytes = jnp.dtype(mxu_dtype).itemsize
    out_bytes = jnp.dtype(out_dtype).itemsize
    sub = 8 * (4 // mxu_bytes)  # sublane multiple: 8 for f32, 16 for bf16 (packed rows).

    D_pad = _round_up(D, 128)
    H_pad = _round_up(H, 128)

    cap = _vmem_capacity_bytes()
    tile_budget = cap // 2          # leave headroom for internal scratch / bookkeeping
    vmem_limit = (cap * 3) // 4

    # --- Row tile: large to amortize weight streaming; >= 2 tiles when possible (v7x has 2 TCs).
    M_min = _round_up(M, sub)
    TM = _round_up(min(tm, M_min), sub)
    if pl.cdiv(M_min, TM) < 2 and M_min >= 2 * sub:
        TM = _round_up(pl.cdiv(M_min, 2), sub)

    # --- Hidden tile: prefer the full hidden dim (weight blocks invariant across the whole grid,
    #     so Pallas fetches W1/W2 exactly once per call); shrink in 128-steps if VMEM-tight,
    #     then shrink TM as a last resort.
    def footprint(tm_, th_):
        dbuf_in = 2 * (tm_ * D_pad * mxu_bytes       # x tile
                       + D_pad * th_ * mxu_bytes     # w1 tile
                       + th_ * D_pad * mxu_bytes     # w2 tile
                       + th_ * 4 + D_pad * 4)        # b1, b2 (f32)
        dbuf_out = 2 * tm_ * D_pad * out_bytes       # output tile
        acc = tm_ * D_pad * 4                        # f32 accumulator scratch
        return dbuf_in + dbuf_out + acc

    TH = H_pad if th is None else _round_up(min(th, H_pad), 128)
    while footprint(TM, TH) > tile_budget and TH > 128:
        TH = _round_up(TH // 2, 128)
    while footprint(TM, TH) > tile_budget and TM > sub:
        TM = _round_up(TM // 2, sub)

    M_pad = _round_up(M_min, TM)
    H_pad = _round_up(H_pad, TH)

    # --- Pad (zero-padding is exact for this math) and cast the MXU operands.
    x2d = jnp.pad(x.reshape(M, D), ((0, M_pad - M), (0, D_pad - D))).astype(mxu_dtype)
    w1p = jnp.pad(w1, ((0, D_pad - D), (0, H_pad - H))).astype(mxu_dtype)
    w2p = jnp.pad(w2, ((0, H_pad - H), (0, D_pad - D))).astype(mxu_dtype)
    b1p = jnp.pad(b1.astype(jnp.float32), (0, H_pad - H)).reshape(1, H_pad)
    b2p = jnp.pad(b2.astype(jnp.float32), (0, D_pad - D)).reshape(1, D_pad)

    grid = (M_pad // TM, H_pad // TH)
    row_tiles = grid[0]
    weight_fetches = 1 if TH == H_pad else row_tiles  # invariant blocks are fetched once

    cost = pl.CostEstimate(
        flops=4 * M_pad * D_pad * H_pad,                     # two matmuls (2 flops / MAC)
        transcendentals=0,                                   # erf lowers to a VALU polynomial
        bytes_accessed=(M_pad * D_pad * (mxu_bytes + out_bytes)          # x in + out
                        + weight_fetches * 2 * D_pad * H_pad * mxu_bytes  # W1 + W2 streaming
                        + 4 * (H_pad + D_pad)),                           # biases
    )

    out2d = pl.pallas_call(
        ffn_kernel,
        out_shape=jax.ShapeDtypeStruct((M_pad, D_pad), out_dtype),
        grid_spec=pltpu.PrefetchScalarGridSpec(
            num_scalar_prefetch=0,
            grid=grid,
            in_specs=[
                pl.BlockSpec((TM, D_pad), lambda i, j: (i, 0)),   # x row tile (streamed)
                pl.BlockSpec((D_pad, TH), lambda i, j: (0, j)),   # w1 hidden tile
                pl.BlockSpec((1, TH), lambda i, j: (0, j)),       # b1 hidden tile
                pl.BlockSpec((TH, D_pad), lambda i, j: (j, 0)),   # w2 hidden tile
                pl.BlockSpec((1, D_pad), lambda i, j: (0, 0)),    # b2 (resident)
            ],
            out_specs=pl.BlockSpec((TM, D_pad), lambda i, j: (i, 0)),
            scratch_shapes=[pltpu.VMEM((TM, D_pad), jnp.float32)],
        ),
        compiler_params=pltpu.CompilerParams(
            dimension_semantics=("parallel", "arbitrary"),
            vmem_limit_bytes=int(vmem_limit),
        ),
        cost_estimate=cost,
    )(x2d, w1p, b1p, w2p, b2p)

    return out2d[:M, :D].reshape(B, S, D)


def init_params(key, dim, hidden_dim):
    """Deterministic init mimicking PyTorch nn.Linear default (uniform +/- 1/sqrt(fan_in))."""
    k1, k2, k3, k4 = jax.random.split(key, 4)
    bound1 = 1.0 / math.sqrt(dim)
    bound2 = 1.0 / math.sqrt(hidden_dim)
    # Stored as (in, out) so the kernel does x @ W directly.
    w1 = jax.random.uniform(k1, (dim, hidden_dim), jnp.float32, -bound1, bound1)
    b1 = jax.random.uniform(k2, (hidden_dim,), jnp.float32, -bound1, bound1)
    w2 = jax.random.uniform(k3, (hidden_dim, dim), jnp.float32, -bound2, bound2)
    b2 = jax.random.uniform(k4, (dim,), jnp.float32, -bound2, bound2)
    return w1, b1, w2, b2


def feed_forward_ref_matched(x, w1, b1, w2, b2, mxu_dtype=jnp.bfloat16):
    """Pure-JAX reference matching the kernel's numerics (bf16 MXU inputs, f32 accumulation)."""
    h = jnp.dot(x.astype(mxu_dtype), w1.astype(mxu_dtype),
                preferred_element_type=jnp.float32) + b1
    h = 0.5 * h * (1.0 + jax.lax.erf(h * _INV_SQRT2))
    return (jnp.dot(h.astype(mxu_dtype), w2.astype(mxu_dtype),
                    preferred_element_type=jnp.float32) + b2).astype(x.dtype)


def feed_forward_ref_f32(x, w1, b1, w2, b2):
    """Full-precision f32 reference (PyTorch-equivalent math)."""
    h = jnp.dot(x, w1, precision=jax.lax.Precision.HIGHEST) + b1
    h = 0.5 * h * (1.0 + jax.lax.erf(h * _INV_SQRT2))
    return jnp.dot(h, w2, precision=jax.lax.Precision.HIGHEST) + b2


if __name__ == "__main__":
    key = jax.random.PRNGKey(0)
    kx, kp, kx2, kp2 = jax.random.split(key, 4)

    # Small demo matching the module defaults: dim=32, hidden_dim = dim * 4.
    batch, seq, dim = 2, 8, 32
    hidden_dim = dim * 4
    x = jax.random.normal(kx, (batch, seq, dim), jnp.float32)
    w1, b1, w2, b2 = init_params(kp, dim, hidden_dim)

    out = jax.block_until_ready(feed_forward(x, w1, b1, w2, b2))
    assert out.shape == x.shape
    ref_m = feed_forward_ref_matched(x, w1, b1, w2, b2)
    ref_f = feed_forward_ref_f32(x, w1, b1, w2, b2)
    assert jnp.allclose(out, ref_m, atol=1e-4, rtol=1e-4), "mismatch vs numerics-matched reference"
    assert jnp.allclose(out, ref_f, atol=5e-2, rtol=5e-2), "mismatch vs f32 reference (loose)"

    # Larger check exercising both grid axes (>=2 row tiles + multi-step hidden reduction).
    batch2, seq2, dim2 = 2, 32, 128
    hidden2 = dim2 * 4
    x2 = jax.random.normal(kx2, (batch2, seq2, dim2), jnp.float32)
    p2 = init_params(kp2, dim2, hidden2)
    out2 = jax.block_until_ready(feed_forward(x2, *p2, tm=32, th=128))
    assert out2.shape == x2.shape
    ref2_m = feed_forward_ref_matched(x2, *p2)
    ref2_f = feed_forward_ref_f32(x2, *p2)
    assert jnp.allclose(out2, ref2_m, atol=1e-4, rtol=1e-4), "mismatch vs matched reference (tiled)"
    assert jnp.allclose(out2, ref2_f, atol=5e-2, rtol=5e-2), "mismatch vs f32 reference (tiled)"

    print("KERNEL_OK")
</pallas_src>

<mosaic_0001>
module attributes {stable_mosaic.version = 11 : i64} {
  func.func @ffn_kernel(%arg0: i32, %arg1: i32, %arg2: memref<16x128xbf16, #tpu.memory_space<vmem>>, %arg3: memref<128x128xbf16, #tpu.memory_space<vmem>>, %arg4: memref<1x128xf32, #tpu.memory_space<vmem>>, %arg5: memref<128x128xbf16, #tpu.memory_space<vmem>>, %arg6: memref<1x128xf32, #tpu.memory_space<vmem>>, %arg7: memref<16x128xf32, #tpu.memory_space<vmem>>, %arg8: memref<16x128xf32, #tpu.memory_space<vmem>>) attributes {dimension_semantics = [#tpu.dimension_semantics<parallel>, #tpu.dimension_semantics<arbitrary>], iteration_bounds = array<i64: 1, 1>, scalar_prefetch = 0 : i64, scratch_operands = 1 : i64, tpu.core_type = #tpu.core_type<tc>, window_params = [{transform_indices = @transform_0, window_bounds = array<i64: 16, 128>}, {transform_indices = @transform_1, window_bounds = array<i64: 128, 128>}, {transform_indices = @transform_2, window_bounds = array<i64: 1, 128>}, {transform_indices = @transform_3, window_bounds = array<i64: 128, 128>}, {pipeline_mode = #tpu.pipeline_mode<synchronous>, transform_indices = @transform_4, window_bounds = array<i64: 1, 128>}, {transform_indices = @transform_5, window_bounds = array<i64: 16, 128>}]} {
    %c0_i32 = arith.constant 0 : i32
    %0 = arith.cmpi eq, %arg1, %c0_i32 : i32
    %1 = arith.extui %0 : i1 to i32
    %c0_i32_0 = arith.constant 0 : i32
    %2 = arith.cmpi ne, %1, %c0_i32_0 : i32
    scf.if %2 {
      %cst_18 = arith.constant 0.000000e+00 : f32
      %26 = vector.broadcast %cst_18 : f32 to vector<16x128xf32>
      %c0_19 = arith.constant 0 : index
      %c0_20 = arith.constant 0 : index
      %27 = vector.load %arg8[%c0_19, %c0_20] : memref<16x128xf32, #tpu.memory_space<vmem>>, vector<16x128xf32>
      tpu.vector_store %arg8[%c0_19, %c0_20], %26 {strides = array<i32>} : memref<16x128xf32, #tpu.memory_space<vmem>>, vector<16x128xf32>,
    } else {
    }
    %c0 = arith.constant 0 : index
    %c0_1 = arith.constant 0 : index
    %3 = vector.load %arg2[%c0, %c0_1] : memref<16x128xbf16, #tpu.memory_space<vmem>>, vector<16x128xbf16>
    %c0_2 = arith.constant 0 : index
    %c0_3 = arith.constant 0 : index
    %4 = vector.load %arg3[%c0_2, %c0_3] : memref<128x128xbf16, #tpu.memory_space<vmem>>, vector<128x128xbf16>
    %cst = arith.constant dense<0.000000e+00> : vector<16x128xf32>
    %5 = tpu.matmul %3, %4, %cst {dimension_numbers = #tpu.dot_dimension_numbers<[1], [0], [0], [1], [0, 0, 1, 1], [], []>} : vector<16x128xbf16>, vector<128x128xbf16>, vector<16x128xf32> -> vector<16x128xf32>
    %c0_4 = arith.constant 0 : index
    %c0_5 = arith.constant 0 : index
    %6 = vector.load %arg4[%c0_4, %c0_5] : memref<1x128xf32, #tpu.memory_space<vmem>>, vector<1x128xf32>
    %7 = vector.broadcast %6 : vector<1x128xf32> to vector<16x128xf32>
    %8 = arith.addf %5, %7 : vector<16x128xf32>
    %cst_6 = arith.constant 5.000000e-01 : f32
    %9 = vector.broadcast %cst_6 : f32 to vector<16x128xf32>
    %10 = arith.mulf %9, %8 : vector<16x128xf32>
    %cst_7 = arith.constant 0.707106769 : f32
    %11 = vector.broadcast %cst_7 : f32 to vector<16x128xf32>
    %12 = arith.mulf %8, %11 : vector<16x128xf32>
    %13 = math.erf %12 : vector<16x128xf32>
    %cst_8 = arith.constant 1.000000e+00 : f32
    %14 = vector.broadcast %cst_8 : f32 to vector<16x128xf32>
    %15 = arith.addf %14, %13 : vector<16x128xf32>
    %16 = arith.mulf %10, %15 : vector<16x128xf32>
    %c0_9 = arith.constant 0 : index
    %c0_10 = arith.constant 0 : index
    %17 = vector.load %arg8[%c0_9, %c0_10] : memref<16x128xf32, #tpu.memory_space<vmem>>, vector<16x128xf32>
    %18 = arith.truncf %16 : vector<16x128xf32> to vector<16x128xbf16>
    %c0_11 = arith.constant 0 : index
    %c0_12 = arith.constant 0 : index
    %19 = vector.load %arg5[%c0_11, %c0_12] : memref<128x128xbf16, #tpu.memory_space<vmem>>, vector<128x128xbf16>
    %cst_13 = arith.constant dense<0.000000e+00> : vector<16x128xf32>
    %20 = tpu.matmul %18, %19, %cst_13 {dimension_numbers = #tpu.dot_dimension_numbers<[1], [0], [0], [1], [0, 0, 1, 1], [], []>} : vector<16x128xbf16>, vector<128x128xbf16>, vector<16x128xf32> -> vector<16x128xf32>
    %21 = arith.addf %17, %20 : vector<16x128xf32>
    %c0_14 = arith.constant 0 : index
    %c0_15 = arith.constant 0 : index
    %22 = vector.load %arg8[%c0_14, %c0_15] : memref<16x128xf32, #tpu.memory_space<vmem>>, vector<16x128xf32>
    tpu.vector_store %arg8[%c0_14, %c0_15], %21 {strides = array<i32>} : memref<16x128xf32, #tpu.memory_space<vmem>>, vector<16x128xf32>,
    %c0_i32_16 = arith.constant 0 : i32
    %23 = arith.cmpi eq, %arg1, %c0_i32_16 : i32
    %24 = arith.extui %23 : i1 to i32
    %c0_i32_17 = arith.constant 0 : i32
    %25 = arith.cmpi ne, %24, %c0_i32_17 : i32
    scf.if %25 {
      %c0_18 = arith.constant 0 : index
      %c0_19 = arith.constant 0 : index
      %26 = vector.load %arg8[%c0_18, %c0_19] : memref<16x128xf32, #tpu.memory_space<vmem>>, vector<16x128xf32>
      %c0_20 = arith.constant 0 : index
      %c0_21 = arith.constant 0 : index
      %27 = vector.load %arg6[%c0_20, %c0_21] : memref<1x128xf32, #tpu.memory_space<vmem>>, vector<1x128xf32>
      %28 = vector.broadcast %27 : vector<1x128xf32> to vector<16x128xf32>
      %29 = arith.addf %26, %28 : vector<16x128xf32>
      %c0_22 = arith.constant 0 : index
      %c0_23 = arith.constant 0 : index
      %30 = vector.load %arg7[%c0_22, %c0_23] : memref<16x128xf32, #tpu.memory_space<vmem>>, vector<16x128xf32>
      tpu.vector_store %arg7[%c0_22, %c0_23], %29 {strides = array<i32>} : memref<16x128xf32, #tpu.memory_space<vmem>>, vector<16x128xf32>,
    } else {
    }
    return
  }
  func.func @transform_0(%arg0: i32, %arg1: i32) -> (i32, i32) {
    %c0_i32 = arith.constant 0 : i32
    %c0_i32_0 = arith.constant 0 : i32
    return %arg0, %c0_i32 : i32, i32
  }
  func.func @transform_1(%arg0: i32, %arg1: i32) -> (i32, i32) {
    %c0_i32 = arith.constant 0 : i32
    %c0_i32_0 = arith.constant 0 : i32
    return %c0_i32, %arg1 : i32, i32
  }
  func.func @transform_2(%arg0: i32, %arg1: i32) -> (i32, i32) {
    %c0_i32 = arith.constant 0 : i32
    %c0_i32_0 = arith.constant 0 : i32
    return %c0_i32, %arg1 : i32, i32
  }
  func.func @transform_3(%arg0: i32, %arg1: i32) -> (i32, i32) {
    %c0_i32 = arith.constant 0 : i32
    %c0_i32_0 = arith.constant 0 : i32
    return %arg1, %c0_i32 : i32, i32
  }
  func.func @transform_4(%arg0: i32, %arg1: i32) -> (i32, i32) {
    %c0_i32 = arith.constant 0 : i32
    %c0_i32_0 = arith.constant 0 : i32
    %c0_i32_1 = arith.constant 0 : i32
    return %c0_i32, %c0_i32_0 : i32, i32
  }
  func.func @transform_5(%arg0: i32, %arg1: i32) -> (i32, i32) {
    %c0_i32 = arith.constant 0 : i32
    %c0_i32_0 = arith.constant 0 : i32
    return %arg0, %c0_i32 : i32, i32
  }
}

</mosaic_0001>

<llo_original>
// kernel: tpu_custom_call.1
$region0: #{tpu_custom_call.1}
  #allocation0 [shape = 'u32[]', space=smem, size = 0x4, offset = 0x4, fixed_abs, tag = 'smem constant byte address 0x4 - core index']
  #allocation1 [shape = 'u32[144,128]{1,0:T(1,128)}', space=vmem, size = 0x12000, scoped, tag = 'internal scratch']
  #allocation2 [shape = 'f32[16,128]{1,0:T(8,128)}', space=vmem, size = 0x2000, scoped, tag = 'scratch operand']
  %s0 = inlined_call_operand.hbm [shape: bf16[16,128], index: 0, kind: input, shape index: {}]
  %s1 = inlined_call_operand.hbm [shape: bf16[128,128], index: 1, kind: input, shape index: {}]
  %s2 = inlined_call_operand.vmem [shape: f32[1,128], index: 2, kind: input, shape index: {}]
  %s3 = inlined_call_operand.hbm [shape: bf16[128,128], index: 3, kind: input, shape index: {}]
  %s4 = inlined_call_operand.vmem [shape: f32[1,128], index: 4, kind: input, shape index: {}]
  %s5 = inlined_call_operand.hbm [shape: f32[16,128], index: 5, kind: output, shape index: {}]
  %s6 = sld [smem:[#allocation0]]
  $region50: #{tpu_custom_call.1} parent=0
    _
  %s8 = ssub.s32 1, %s6
  %s9 = scalar_select 0, %s8, %s6
  $region1: #{tpu_custom_call.1} parent=0
    #allocation3 [shape = 'u8[4096]{0}', space=vmem, size = 0x1000, scoped, tag = 'input window, operand 0, single buffered']
    #allocation4 [shape = 's32[1]{0}', space=sflag, size = 0x4, scoped, tag = 'scoped memory for tpu_custom_call.1']
    #allocation5 [shape = 's32[1]{0}', space=sflag, size = 0x4, scoped, tag = 'scoped memory for tpu_custom_call.1']
    #allocation6 [shape = 'u8[32768]{0}', space=vmem, size = 0x8000, scoped, tag = 'input window, operand 1, single buffered']
    #allocation7 [shape = 's32[1]{0}', space=sflag, size = 0x4, scoped, tag = 'scoped memory for tpu_custom_call.1']
    #allocation8 [shape = 'u8[32768]{0}', space=vmem, size = 0x8000, scoped, tag = 'input window, operand 3, single buffered']
    #allocation9 [shape = 'u8[8192]{0}', space=vmem, size = 0x2000, scoped, tag = 'output window, operand 0, single buffered']
    %10 = vsyncpa [#allocation4], 0
    %11 = vsyncpa [#allocation7], 0
    %12 = vsyncpa [#allocation5], 0
    // Predicated region
    $region2: #{tpu_custom_call.1} parent=1 // pred_check
      _
    $region3: #{tpu_custom_call.1} parent=1 // pred_check_branch
      %14 = sbr.rel (0) target = $region5
    $region4: #{tpu_custom_call.1} parent=1 // pred_region
      %s16 = ssub.s32 128, 128
      %17 = vsyncadd [#allocation4], %s16
      %s18 = sshll.u32 [#allocation3], 4
      %s19 = int_to_ptr.vmem [resolvable:$true] %s18
      %24 = dma.hbm_to_vmem [thread:$0]  %s0, 128, %s19, [#allocation4], 64, 64, 4
    $region5: #{tpu_custom_call.1} parent=1 // pred_fallthru
      _
    // Predicated region
    $region6: #{tpu_custom_call.1} parent=1 // pred_check
      _
    $region7: #{tpu_custom_call.1} parent=1 // pred_check_branch
      %26 = sbr.rel (0) target = $region9
    $region8: #{tpu_custom_call.1} parent=1 // pred_region
      %s28 = ssub.s32 1024, 1024
      %29 = vsyncadd [#allocation7], %s28
      %s30 = sshll.u32 [#allocation6], 4
      %s31 = int_to_ptr.vmem [resolvable:$true] %s30
      %36 = dma.hbm_to_vmem [thread:$0]  %s1, 1024, %s31, [#allocation7], 64, 64, 4
    $region9: #{tpu_custom_call.1} parent=1 // pred_fallthru
      _
    // Predicated region
    $region10: #{tpu_custom_call.1} parent=1 // pred_check
      _
    $region11: #{tpu_custom_call.1} parent=1 // pred_check_branch
      %38 = sbr.rel (0) target = $region13
    $region12: #{tpu_custom_call.1} parent=1 // pred_region
      _
    $region13: #{tpu_custom_call.1} parent=1 // pred_fallthru
      _
    // Predicated region
    $region14: #{tpu_custom_call.1} parent=1 // pred_check
      _
    $region15: #{tpu_custom_call.1} parent=1 // pred_check_branch
      %40 = sbr.rel (0) target = $region17
    $region16: #{tpu_custom_call.1} parent=1 // pred_region
      %s42 = ssub.s32 1024, 1024
      %43 = vsyncadd [#allocation7], %s42
      %s44 = sshll.u32 [#allocation8], 4
      %s45 = int_to_ptr.vmem [resolvable:$true] %s44
      %50 = dma.hbm_to_vmem [thread:$0]  %s3, 1024, %s45, [#allocation7], 64, 64, 4
    $region17: #{tpu_custom_call.1} parent=1 // pred_fallthru
      _
    // Predicated region
    $region18: #{tpu_custom_call.1} parent=1 // pred_check
      _
    $region19: #{tpu_custom_call.1} parent=1 // pred_check_branch
      %52 = sbr.rel (0) target = $region21
    $region20: #{tpu_custom_call.1} parent=1 // pred_region
      _
    $region21: #{tpu_custom_call.1} parent=1 // pred_fallthru
      _
    // Predicated region
    $region22: #{tpu_custom_call.1} parent=1 // pred_check
      _
    $region23: #{tpu_custom_call.1} parent=1 // pred_check_branch
      %54 = sbr.rel (0) target = $region25
    $region24: #{tpu_custom_call.1} parent=1 // pred_region
      %55 = dma.done [#allocation4], 128
    $region25: #{tpu_custom_call.1} parent=1 // pred_fallthru
      _
    // Predicated region
    $region26: #{tpu_custom_call.1} parent=1 // pred_check
      _
    $region27: #{tpu_custom_call.1} parent=1 // pred_check_branch
      %57 = sbr.rel (0) target = $region29
    $region28: #{tpu_custom_call.1} parent=1 // pred_region
      %58 = dma.done [#allocation7], 1024
    $region29: #{tpu_custom_call.1} parent=1 // pred_fallthru
      _
    // Predicated region
    $region30: #{tpu_custom_call.1} parent=1 // pred_check
      _
    $region31: #{tpu_custom_call.1} parent=1 // pred_check_branch
      %60 = sbr.rel (0) target = $region33
    $region32: #{tpu_custom_call.1} parent=1 // pred_region
      %61 = dma.done [#allocation7], 1024
    $region33: #{tpu_custom_call.1} parent=1 // pred_fallthru
      _
    %p63 = scmp.eq.s32.totalorder 0, 0
    // Predicated region
    $region34: #{tpu_custom_call.1} parent=1 // pred_check
      %p64 = pneg %p63
    $region35: #{tpu_custom_call.1} parent=1 // pred_check_branch
      %66 = sbr.rel (%p64) target = $region37
    $region36: #{tpu_custom_call.1} parent=1 // pred_region
      %67 = vst [vmem:[#allocation2] sm:$0xff] 0.0
      %68 = vst [vmem:[#allocation2 + $0x8] sm:$0xff] 0.0
    $region37: #{tpu_custom_call.1} parent=1 // pred_fallthru
      _
    %v69 = vld [vmem:[#allocation3] sm:$0xf]
    %v70 = vld [vmem:[#allocation3 + $0x4] sm:$0xf]
    %v71 = vld [vmem:[#allocation6] sm:$0xf]
    %v72 = vld [vmem:[#allocation6 + $0x4] sm:$0xf]
    %v73 = vld [vmem:[#allocation6 + $0x8] sm:$0xf]
    %v74 = vld [vmem:[#allocation6 + $0xc] sm:$0xf]
    %v75 = vld [vmem:[#allocation6 + $0x10] sm:$0xf]
    %v76 = vld [vmem:[#allocation6 + $0x14] sm:$0xf]
    %v77 = vld [vmem:[#allocation6 + $0x18] sm:$0xf]
    %v78 = vld [vmem:[#allocation6 + $0x1c] sm:$0xf]
    %v79 = vld [vmem:[#allocation6 + $0x20] sm:$0xf]
    %v80 = vld [vmem:[#allocation6 + $0x24] sm:$0xf]
    %v81 = vld [vmem:[#allocation6 + $0x28] sm:$0xf]
    %v82 = vld [vmem:[#allocation6 + $0x2c] sm:$0xf]
    %v83 = vld [vmem:[#allocation6 + $0x30] sm:$0xf]
    %v84 = vld [vmem:[#allocation6 + $0x34] sm:$0xf]
    %v85 = vld [vmem:[#allocation6 + $0x38] sm:$0xf]
    %v86 = vld [vmem:[#allocation6 + $0x3c] sm:$0xf]
    %v87 = vld [vmem:[%s2] sm:$0x1]
    %v89 = vlaneseq
    %v90 = vshrl.u32 %v89, 7
    %v91 = vsub.s32 0, %v90
    %v92 = vrot.slane %v87, %v91
    %v96 = vunpack.c.l.b16 %v69
    %v97 = vunpack.c.l.b16 %v70
    %v98 = vpack.c.b16 %v97, %v96
    %v116 = vunpack.c.l.b16 %v71
    %v117 = vunpack.c.l.b16 %v72
    %v118 = vunpack.c.l.b16 %v73
    %v119 = vunpack.c.l.b16 %v74
    %v120 = vunpack.c.l.b16 %v75
    %v121 = vunpack.c.l.b16 %v76
    %v122 = vunpack.c.l.b16 %v77
    %v123 = vunpack.c.l.b16 %v78
    %v124 = vunpack.c.l.b16 %v79
    %v125 = vunpack.c.l.b16 %v80
    %v126 = vunpack.c.l.b16 %v81
    %v127 = vunpack.c.l.b16 %v82
    %v128 = vunpack.c.l.b16 %v83
    %v129 = vunpack.c.l.b16 %v84
    %v130 = vunpack.c.l.b16 %v85
    %v131 = vunpack.c.l.b16 %v86
    %v132 = vpack.c.b16 %v117, %v116
    %v133 = vpack.c.b16 %v119, %v118
    %v134 = vpack.c.b16 %v121, %v120
    %v135 = vpack.c.b16 %v123, %v122
    %v136 = vpack.c.b16 %v125, %v124
    %v137 = vpack.c.b16 %v127, %v126
    %v138 = vpack.c.b16 %v129, %v128
    %v139 = vpack.c.b16 %v131, %v130
    %148 = vmatprep.subr.bf16.mxu0 0
    %149 = vmatpush1.bf16.msra.mxu0 %v132
    %150 = vmatprep.subr.bf16.mxu0 0
    %151 = vmatpush1.bf16.msra.mxu0 %v133
    %152 = vmatprep.subr.bf16.mxu0 0
    %153 = vmatpush1.bf16.msra.mxu0 %v134
    %154 = vmatprep.subr.bf16.mxu0 0
    %155 = vmatpush1.bf16.msra.mxu0 %v135
    %156 = vmatprep.subr.bf16.mxu0 0
    %157 = vmatpush1.bf16.msra.mxu0 %v136
    %158 = vmatprep.subr.bf16.mxu0 0
    %159 = vmatpush1.bf16.msra.mxu0 %v137
    %160 = vmatprep.subr.bf16.mxu0 0
    %161 = vmatpush1.bf16.msra.mxu0 %v138
    %162 = vmatprep.subr.bf16.mxu0 0
    %163 = vmatpush1.bf16.msra.mxu0 %v139
    %164 = vmatprep.subr.bf16.mxu0 0
    %165 = vmatpush1.bf16.msra.mxu0 0
    %166 = vmatprep.subr.bf16.mxu0 0
    %167 = vmatpush1.bf16.msra.mxu0 0
    %168 = vmatprep.subr.bf16.mxu0 0
    %169 = vmatpush1.bf16.msra.mxu0 0
    %170 = vmatprep.subr.bf16.mxu0 0
    %171 = vmatpush1.bf16.msra.mxu0 0
    %172 = vmatprep.subr.bf16.mxu0 0
    %173 = vmatpush1.bf16.msra.mxu0 0
    %174 = vmatprep.subr.bf16.mxu0 0
    %175 = vmatpush1.bf16.msra.mxu0 0
    %176 = vmatprep.subr.bf16.mxu0 0
    %177 = vmatpush1.bf16.msra.mxu0 0
    %178 = vmatprep.subr.bf16.mxu0 0
    %179 = vmatpush1.bf16.msra.mxu0 0
    %180 = vmatprep.mubr.bf16.mxu0 0
    %181 = vmatmul.mubr.bf16.gmra.mrb[0].mxu0 %v98
    %v182 = vpop.f32.mrb[0].mxu0
    %v183 = vadd.f32 %v92, %v182
    %v184 = vpop.f32.mrb[0].mxu0
    %v185 = vpop.f32.mrb[0].mxu0
    %v186 = vadd.f32 %v92, %v185
    %v187 = vpop.f32.mrb[0].mxu0
    %188 = vdwg.mxu0
    %v189 = vmul.f32 %v183, 0.5
    %v190 = vmul.f32 %v186, 0.5
    %v191 = vmul.f32 %v183, 0.70710677
    %v192 = vmul.f32 %v186, 0.70710677
    %v193 = verf.f32.pop %v191
    %v194 = verf.f32.pop %v192
    %v195 = vadd.f32 %v193, 1.0
    %v196 = vadd.f32 %v194, 1.0
    %v197 = vmul.f32 %v189, %v195
    %v198 = vmul.f32 %v190, %v196
    %v199 = vld [vmem:[#allocation2] sm:$0xff]
    %v200 = vld [vmem:[#allocation2 + $0x8] sm:$0xff]
    %v201 = vpack.c.bf16 %v198, %v197
    %v202 = vld [vmem:[#allocation8] sm:$0xf]
    %v203 = vld [vmem:[#allocation8 + $0x4] sm:$0xf]
    %v204 = vld [vmem:[#allocation8 + $0x8] sm:$0xf]
    %v205 = vld [vmem:[#allocation8 + $0xc] sm:$0xf]
    %v206 = vld [vmem:[#allocation8 + $0x10] sm:$0xf]
    %v207 = vld [vmem:[#allocation8 + $0x14] sm:$0xf]
    %v208 = vld [vmem:[#allocation8 + $0x18] sm:$0xf]
    %v209 = vld [vmem:[#allocation8 + $0x1c] sm:$0xf]
    %v210 = vld [vmem:[#allocation8 + $0x20] sm:$0xf]
    %v211 = vld [vmem:[#allocation8 + $0x24] sm:$0xf]
    %v212 = vld [vmem:[#allocation8 + $0x28] sm:$0xf]
    %v213 = vld [vmem:[#allocation8 + $0x2c] sm:$0xf]
    %v214 = vld [vmem:[#allocation8 + $0x30] sm:$0xf]
    %v215 = vld [vmem:[#allocation8 + $0x34] sm:$0xf]
    %v216 = vld [vmem:[#allocation8 + $0x38] sm:$0xf]
    %v217 = vld [vmem:[#allocation8 + $0x3c] sm:$0xf]
    %v234 = vunpack.c.l.b16 %v202
    %v235 = vunpack.c.l.b16 %v203
    %v236 = vunpack.c.l.b16 %v204
    %v237 = vunpack.c.l.b16 %v205
    %v238 = vunpack.c.l.b16 %v206
    %v239 = vunpack.c.l.b16 %v207
    %v240 = vunpack.c.l.b16 %v208
    %v241 = vunpack.c.l.b16 %v209
    %v242 = vunpack.c.l.b16 %v210
    %v243 = vunpack.c.l.b16 %v211
    %v244 = vunpack.c.l.b16 %v212
    %v245 = vunpack.c.l.b16 %v213
    %v246 = vunpack.c.l.b16 %v214
    %v247 = vunpack.c.l.b16 %v215
    %v248 = vunpack.c.l.b16 %v216
    %v249 = vunpack.c.l.b16 %v217
    %v250 = vpack.c.b16 %v235, %v234
    %v251 = vpack.c.b16 %v237, %v236
    %v252 = vpack.c.b16 %v239, %v238
    %v253 = vpack.c.b16 %v241, %v240
    %v254 = vpack.c.b16 %v243, %v242
    %v255 = vpack.c.b16 %v245, %v244
    %v256 = vpack.c.b16 %v247, %v246
    %v257 = vpack.c.b16 %v249, %v248
    %266 = vmatprep.subr.bf16.mxu0 0
    %267 = vmatpush1.bf16.msra.mxu0 %v250
    %268 = vmatprep.subr.bf16.mxu0 0
    %269 = vmatpush1.bf16.msra.mxu0 %v251
    %270 = vmatprep.subr.bf16.mxu0 0
    %271 = vmatpush1.bf16.msra.mxu0 %v252
    %272 = vmatprep.subr.bf16.mxu0 0
    %273 = vmatpush1.bf16.msra.mxu0 %v253
    %274 = vmatprep.subr.bf16.mxu0 0
    %275 = vmatpush1.bf16.msra.mxu0 %v254
    %276 = vmatprep.subr.bf16.mxu0 0
    %277 = vmatpush1.bf16.msra.mxu0 %v255
    %278 = vmatprep.subr.bf16.mxu0 0
    %279 = vmatpush1.bf16.msra.mxu0 %v256
    %280 = vmatprep.subr.bf16.mxu0 0
    %281 = vmatpush1.bf16.msra.mxu0 %v257
    %282 = vmatprep.subr.bf16.mxu0 0
    %283 = vmatpush1.bf16.msra.mxu0 0
    %284 = vmatprep.subr.bf16.mxu0 0
    %285 = vmatpush1.bf16.msra.mxu0 0
    %286 = vmatprep.subr.bf16.mxu0 0
    %287 = vmatpush1.bf16.msra.mxu0 0
    %288 = vmatprep.subr.bf16.mxu0 0
    %289 = vmatpush1.bf16.msra.mxu0 0
    %290 = vmatprep.subr.bf16.mxu0 0
    %291 = vmatpush1.bf16.msra.mxu0 0
    %292 = vmatprep.subr.bf16.mxu0 0
    %293 = vmatpush1.bf16.msra.mxu0 0
    %294 = vmatprep.subr.bf16.mxu0 0
    %295 = vmatpush1.bf16.msra.mxu0 0
    %296 = vmatprep.subr.bf16.mxu0 0
    %297 = vmatpush1.bf16.msra.mxu0 0
    %298 = vmatprep.mubr.bf16.mxu0 0
    %299 = vmatmul.mubr.bf16.gmra.mrb[0].mxu0 %v201
    %v300 = vpop.f32.mrb[0].mxu0
    %v301 = vadd.f32 0.0, %v300
    %v302 = vpop.f32.mrb[0].mxu0
    %v303 = vpop.f32.mrb[0].mxu0
    %v304 = vadd.f32 0.0, %v303
    %v305 = vpop.f32.mrb[0].mxu0
    %306 = vdwg.mxu0
    %v307 = vadd.f32 %v199, %v301
    %v308 = vadd.f32 %v200, %v304
    %309 = vst [vmem:[#allocation2] sm:$0xff] %v307
    %310 = vst [vmem:[#allocation2 + $0x8] sm:$0xff] %v308
    // Predicated region
    $region38: #{tpu_custom_call.1} parent=1 // pred_check
      %p311 = pneg %p63
    $region39: #{tpu_custom_call.1} parent=1 // pred_check_branch
      %313 = sbr.rel (%p311) target = $region41
    $region40: #{tpu_custom_call.1} parent=1 // pred_region
      %v314 = vld [vmem:[#allocation2] sm:$0xff]
      %v315 = vld [vmem:[#allocation2 + $0x8] sm:$0xff]
      %v316 = vld [vmem:[%s4] sm:$0x1]
      %v318 = vlaneseq
      %v319 = vshrl.u32 %v318, 7
      %v320 = vsub.s32 0, %v319
      %v321 = vrot.slane %v316, %v320
      %v323 = vadd.f32 %v314, %v321
      %v324 = vadd.f32 %v315, %v321
      %325 = vst [vmem:[#allocation9] sm:$0xff] %v323
      %326 = vst [vmem:[#allocation9 + $0x8] sm:$0xff] %v324
    $region41: #{tpu_custom_call.1} parent=1 // pred_fallthru
      _
    // Predicated region
    $region42: #{tpu_custom_call.1} parent=1 // pred_check
      _
    $region43: #{tpu_custom_call.1} parent=1 // pred_check_branch
      %328 = sbr.rel (0) target = $region45
    $region44: #{tpu_custom_call.1} parent=1 // pred_region
      %s330 = ssub.s32 256, 256
      %331 = vsyncadd [#allocation5], %s330
      %s332 = sshll.u32 [#allocation9], 4
      %s333 = int_to_ptr.vmem [resolvable:$true] %s332
      %338 = dma.vmem_to_hbm [thread:$0]  %s333, 256, %s5, [#allocation5], 128, 128, 8
    $region45: #{tpu_custom_call.1} parent=1 // pred_fallthru
      _
    // Predicated region
    $region46: #{tpu_custom_call.1} parent=1 // pred_check
      _
    $region47: #{tpu_custom_call.1} parent=1 // pred_check_branch
      %340 = sbr.rel (0) target = $region49
    $region48: #{tpu_custom_call.1} parent=1 // pred_region
      %341 = dma.done [#allocation5], 256
    $region49: #{tpu_custom_call.1} parent=1 // pred_fallthru
      _
    %342 = vsyncpa [#allocation4], 1
    %343 = vsyncpa [#allocation7], 1
    %344 = vsyncpa [#allocation5], 1

</llo_original>
